<compile_context>
chip_gen: v7x
topology: tpu7x:2x2x1
jax: 0.10.0
libtpu: 0.0.40
codegen_flags: <defaults>
</compile_context>

<pallas_src>
import jax
import jax.numpy as jnp
from jax.experimental import pallas as pl
from jax.experimental.pallas import tpu as pltpu
import numpy as np


def _silu(x):
    return x * jax.nn.sigmoid(x)


def _round_up(x, m):
    return ((x + m - 1) // m) * m


def _torchmd_net_kernel(emb_ref, batch_ref, wrep_ref, brep_ref,
                        w1_ref, b1_ref, w2row_ref, b2_ref,
                        out_ref, acc_ref):
    i = pl.program_id(1)          # atom-tile (reduction) axis

    @pl.when(i == 0)
    def _():
        acc_ref[...] = jnp.zeros_like(acc_ref)

    emb = emb_ref[...]                                              # [tile_n, H] f32

    # --- representation stand-in: Dense + SiLU (MXU) ---------------------------
    h = _silu(jnp.dot(emb, wrep_ref[...],
                      preferred_element_type=jnp.float32) + brep_ref[...])

    # --- output_model.pre_reduce (Scalar head) ---------------------------------
    a = _silu(jnp.dot(h, w1_ref[...],
                      preferred_element_type=jnp.float32) + b1_ref[...])
    # Width-1 output matmul replaced by VPU multiply + lane reduce.
    y = jnp.sum(a * w2row_ref[...], axis=-1, keepdims=True) + b2_ref[...]  # [tile_n, 1]

    # --- scatter(x, batch, reduce='add'): masked multiply + sublane reduce -----
    tile_n = emb.shape[0]
    b_pad = acc_ref.shape[-1]
    bidx = batch_ref[...]                                           # [tile_n, 1] i32, -1 = pad row
    cols = jax.lax.broadcasted_iota(jnp.int32, (tile_n, b_pad), 1)  # [tile_n, B_pad]
    contrib = jnp.where(bidx == cols, y, 0.0)                       # y broadcast over lanes
    acc_ref[...] += jnp.sum(contrib, axis=0, keepdims=True)         # [1, B_pad]

    @pl.when(i == pl.num_programs(1) - 1)
    def _():
        out_ref[...] = acc_ref[...][None, :, :]                     # [1, 1, B_pad]


def init_params(key, max_z=100, hidden_channels=32):
    h2 = hidden_channels // 2
    ks = jax.random.split(key, 4)
    return {
        "embedding": 0.1 * jax.random.normal(ks[0], (max_z, hidden_channels), jnp.float32),
        "wrep": jax.random.normal(ks[1], (hidden_channels, hidden_channels),
                                  jnp.float32) / jnp.sqrt(hidden_channels),
        "brep": jnp.zeros((1, hidden_channels), jnp.float32),
        "w1": jax.random.normal(ks[2], (hidden_channels, h2),
                                jnp.float32) / jnp.sqrt(hidden_channels),
        "b1": jnp.zeros((1, h2), jnp.float32),
        "w2": jax.random.normal(ks[3], (h2, 1), jnp.float32) / jnp.sqrt(h2),
        "b2": jnp.zeros((1, 1), jnp.float32),
    }


def torchmd_net_forward(params, z, pos, batch=None, num_molecules=1,
                        tile_n=256, num_core_splits=2):
    """Returns (out, tox) with out: [num_molecules, 1], tox: None."""
    if batch is None:
        batch = jnp.zeros_like(z)
    del pos  # TODO(synk): pos only feeds edge construction in the injected rep model.

    hidden = params["wrep"].shape[0]
    h2 = params["w1"].shape[1]
    n = int(z.shape[0])

    # Embedding gather (glue; data-dependent indexing stays in plain JAX).
    emb = params["embedding"][z].astype(jnp.float32)                # [N, H]
    batch2d = batch.astype(jnp.int32)[:, None]                      # [N, 1]

    # --- tiling: atom axis padded to num_splits * tiles_per_split * tile_n -----
    tile_n = min(tile_n, _round_up(n, 8))
    n_tiles = -(-n // tile_n)
    num_splits = num_core_splits if n_tiles >= num_core_splits else 1
    tiles_per_split = -(-n_tiles // num_splits)
    n_pad = num_splits * tiles_per_split * tile_n

    emb_p = jnp.pad(emb, ((0, n_pad - n), (0, 0)))
    batch_p = jnp.pad(batch2d, ((0, n_pad - n), (0, 0)), constant_values=-1)

    b_pad = _round_up(max(int(num_molecules), 1), 128)              # lane-dense output
    w2_row = params["w2"].T                                         # [1, H2]

    cost = pl.CostEstimate(
        flops=int(n_pad * (2 * hidden * hidden + 2 * hidden * h2 + 4 * h2 + 2 * b_pad)),
        transcendentals=int(n_pad * (hidden + h2)),
        bytes_accessed=int(n_pad * (hidden + 1) * 4
                           + (hidden * hidden + hidden + hidden * h2 + 2 * h2 + 1) * 4
                           + num_splits * b_pad * 4),
    )

    atom_block = lambda c, i: (c * tiles_per_split + i, 0)
    const_block = lambda c, i: (0, 0)                               # weights stay resident

    out_parts = pl.pallas_call(
        _torchmd_net_kernel,
        out_shape=jax.ShapeDtypeStruct((num_splits, 1, b_pad), jnp.float32),
        grid_spec=pltpu.PrefetchScalarGridSpec(
            num_scalar_prefetch=0,
            grid=(num_splits, tiles_per_split),
            in_specs=[
                pl.BlockSpec((tile_n, hidden), atom_block),         # emb
                pl.BlockSpec((tile_n, 1), atom_block),              # batch indices
                pl.BlockSpec((hidden, hidden), const_block),        # wrep
                pl.BlockSpec((1, hidden), const_block),             # brep
                pl.BlockSpec((hidden, h2), const_block),            # w1
                pl.BlockSpec((1, h2), const_block),                 # b1
                pl.BlockSpec((1, h2), const_block),                 # w2 (as row)
                pl.BlockSpec((1, 1), const_block),                  # b2
            ],
            out_specs=pl.BlockSpec((1, 1, b_pad), lambda c, i: (c, 0, 0)),
            scratch_shapes=[pltpu.VMEM((1, b_pad), jnp.float32)],
        ),
        compiler_params=pltpu.CompilerParams(
            dimension_semantics=("parallel", "arbitrary")),
        cost_estimate=cost,
    )(emb_p, batch_p, params["wrep"], params["brep"],
      params["w1"], params["b1"], w2_row, params["b2"])

    # Sum per-core partials, drop lane padding, restore [B, 1] layout.
    out = out_parts.sum(axis=0)[0, :num_molecules][:, None]

    # output_model.post_reduce == identity for the Scalar head.
    return out, None


def _reference_forward(params, z, batch, num_molecules):
    emb = params["embedding"][z]
    h = _silu(emb @ params["wrep"] + params["brep"])
    a = _silu(h @ params["w1"] + params["b1"])
    y = a @ params["w2"] + params["b2"]
    out = jnp.zeros((num_molecules, 1), jnp.float32).at[batch].add(y)
    return out


if __name__ == "__main__":
    key = jax.random.PRNGKey(0)
    k_param, k_z, k_pos, k_z2, k_pos2 = jax.random.split(key, 5)

    hidden_channels = 32
    max_z = 100
    params = init_params(k_param, max_z=max_z, hidden_channels=hidden_channels)

    # --- case 1: tiny input, single tile ---------------------------------------
    n_atoms = 16
    num_molecules = 2
    z = jax.random.randint(k_z, (n_atoms,), 1, 10, dtype=jnp.int32)
    pos = jax.random.normal(k_pos, (n_atoms, 3), jnp.float32)
    batch = jnp.concatenate([
        jnp.zeros((n_atoms // 2,), jnp.int32),
        jnp.ones((n_atoms - n_atoms // 2,), jnp.int32),
    ])
    out, tox = torchmd_net_forward(params, z, pos, batch, num_molecules=num_molecules)
    out = jax.block_until_ready(out)
    ref = _reference_forward(params, z, batch, num_molecules)
    np.testing.assert_allclose(np.asarray(out), np.asarray(ref), rtol=1e-5, atol=1e-5)
    assert tox is None

    # --- case 2: exercises multi-tile grid, 2-way core split, atom padding -----
    n_atoms2 = 40
    num_molecules2 = 3
    z2 = jax.random.randint(k_z2, (n_atoms2,), 1, 10, dtype=jnp.int32)
    pos2 = jax.random.normal(k_pos2, (n_atoms2, 3), jnp.float32)
    batch2 = jnp.concatenate([
        jnp.zeros((14,), jnp.int32),
        jnp.ones((13,), jnp.int32),
        jnp.full((13,), 2, jnp.int32),
    ])
    out2, _ = torchmd_net_forward(params, z2, pos2, batch2,
                                  num_molecules=num_molecules2, tile_n=8)
    out2 = jax.block_until_ready(out2)
    ref2 = _reference_forward(params, z2, batch2, num_molecules2)
    np.testing.assert_allclose(np.asarray(out2), np.asarray(ref2), rtol=1e-5, atol=1e-5)

    print("KERNEL_OK")
</pallas_src>

<mosaic_0001>
module attributes {stable_mosaic.version = 11 : i64} {
  func.func @_torchmd_net_kernel(%arg0: i32, %arg1: i32, %arg2: memref<16x32xf32, #tpu.memory_space<vmem>>, %arg3: memref<16x1xi32, #tpu.memory_space<vmem>>, %arg4: memref<32x32xf32, #tpu.memory_space<vmem>>, %arg5: memref<1x32xf32, #tpu.memory_space<vmem>>, %arg6: memref<32x16xf32, #tpu.memory_space<vmem>>, %arg7: memref<1x16xf32, #tpu.memory_space<vmem>>, %arg8: memref<1x16xf32, #tpu.memory_space<vmem>>, %arg9: memref<1x1xf32, #tpu.memory_space<vmem>>, %arg10: memref<1x1x128xf32, #tpu.memory_space<vmem>>, %arg11: memref<1x128xf32, #tpu.memory_space<vmem>>) attributes {dimension_semantics = [#tpu.dimension_semantics<parallel>, #tpu.dimension_semantics<arbitrary>], iteration_bounds = array<i64: 1, 1>, scalar_prefetch = 0 : i64, scratch_operands = 1 : i64, tpu.core_type = #tpu.core_type<tc>, window_params = [{transform_indices = @transform_0, window_bounds = array<i64: 16, 32>}, {transform_indices = @transform_1, window_bounds = array<i64: 16, 1>}, {pipeline_mode = #tpu.pipeline_mode<synchronous>, transform_indices = @transform_2, window_bounds = array<i64: 32, 32>}, {pipeline_mode = #tpu.pipeline_mode<synchronous>, transform_indices = @transform_3, window_bounds = array<i64: 1, 32>}, {pipeline_mode = #tpu.pipeline_mode<synchronous>, transform_indices = @transform_4, window_bounds = array<i64: 32, 16>}, {pipeline_mode = #tpu.pipeline_mode<synchronous>, transform_indices = @transform_5, window_bounds = array<i64: 1, 16>}, {pipeline_mode = #tpu.pipeline_mode<synchronous>, transform_indices = @transform_6, window_bounds = array<i64: 1, 16>}, {pipeline_mode = #tpu.pipeline_mode<synchronous>, transform_indices = @transform_7, window_bounds = array<i64: 1, 1>}, {transform_indices = @transform_8, window_bounds = array<i64: 1, 1, 128>}]} {
    %c0_i32 = arith.constant 0 : i32
    %0 = arith.cmpi eq, %arg1, %c0_i32 : i32
    %1 = arith.extui %0 : i1 to i32
    %c0_i32_0 = arith.constant 0 : i32
    %2 = arith.cmpi ne, %1, %c0_i32_0 : i32
    scf.if %2 {
      %cst_28 = arith.constant 0.000000e+00 : f32
      %50 = vector.broadcast %cst_28 : f32 to vector<1x128xf32>
      %c0_29 = arith.constant 0 : index
      %c0_30 = arith.constant 0 : index
      %51 = vector.load %arg11[%c0_29, %c0_30] : memref<1x128xf32, #tpu.memory_space<vmem>>, vector<1x128xf32>
      tpu.vector_store %arg11[%c0_29, %c0_30], %50 {strides = array<i32>} : memref<1x128xf32, #tpu.memory_space<vmem>>, vector<1x128xf32>,
    } else {
    }
    %c0 = arith.constant 0 : index
    %c0_1 = arith.constant 0 : index
    %3 = vector.load %arg2[%c0, %c0_1] : memref<16x32xf32, #tpu.memory_space<vmem>>, vector<16x32xf32>
    %c0_2 = arith.constant 0 : index
    %c0_3 = arith.constant 0 : index
    %4 = vector.load %arg4[%c0_2, %c0_3] : memref<32x32xf32, #tpu.memory_space<vmem>>, vector<32x32xf32>
    %cst = arith.constant dense<0.000000e+00> : vector<16x32xf32>
    %5 = tpu.matmul %3, %4, %cst {dimension_numbers = #tpu.dot_dimension_numbers<[1], [0], [0], [1], [0, 0, 1, 1], [], []>} : vector<16x32xf32>, vector<32x32xf32>, vector<16x32xf32> -> vector<16x32xf32>
    %c0_4 = arith.constant 0 : index
    %c0_5 = arith.constant 0 : index
    %6 = vector.load %arg5[%c0_4, %c0_5] : memref<1x32xf32, #tpu.memory_space<vmem>>, vector<1x32xf32>
    %7 = vector.broadcast %6 : vector<1x32xf32> to vector<16x32xf32>
    %8 = arith.addf %5, %7 : vector<16x32xf32>
    %9 = arith.negf %8 : vector<16x32xf32>
    %10 = math.exp %9 : vector<16x32xf32>
    %cst_6 = arith.constant 1.000000e+00 : f32
    %11 = vector.broadcast %cst_6 : f32 to vector<16x32xf32>
    %12 = arith.addf %11, %10 : vector<16x32xf32>
    %13 = arith.divf %11, %12 : vector<16x32xf32>
    %14 = arith.mulf %8, %13 : vector<16x32xf32>
    %c0_7 = arith.constant 0 : index
    %c0_8 = arith.constant 0 : index
    %15 = vector.load %arg6[%c0_7, %c0_8] : memref<32x16xf32, #tpu.memory_space<vmem>>, vector<32x16xf32>
    %cst_9 = arith.constant dense<0.000000e+00> : vector<16x16xf32>
    %16 = tpu.matmul %14, %15, %cst_9 {dimension_numbers = #tpu.dot_dimension_numbers<[1], [0], [0], [1], [0, 0, 1, 1], [], []>} : vector<16x32xf32>, vector<32x16xf32>, vector<16x16xf32> -> vector<16x16xf32>
    %c0_10 = arith.constant 0 : index
    %c0_11 = arith.constant 0 : index
    %17 = vector.load %arg7[%c0_10, %c0_11] : memref<1x16xf32, #tpu.memory_space<vmem>>, vector<1x16xf32>
    %18 = vector.broadcast %17 : vector<1x16xf32> to vector<16x16xf32>
    %19 = arith.addf %16, %18 : vector<16x16xf32>
    %20 = arith.negf %19 : vector<16x16xf32>
    %21 = math.exp %20 : vector<16x16xf32>
    %cst_12 = arith.constant 1.000000e+00 : f32
    %22 = vector.broadcast %cst_12 : f32 to vector<16x16xf32>
    %23 = arith.addf %22, %21 : vector<16x16xf32>
    %24 = arith.divf %22, %23 : vector<16x16xf32>
    %25 = arith.mulf %19, %24 : vector<16x16xf32>
    %c0_13 = arith.constant 0 : index
    %c0_14 = arith.constant 0 : index
    %26 = vector.load %arg8[%c0_13, %c0_14] : memref<1x16xf32, #tpu.memory_space<vmem>>, vector<1x16xf32>
    %27 = vector.broadcast %26 : vector<1x16xf32> to vector<16x16xf32>
    %28 = arith.mulf %25, %27 : vector<16x16xf32>
    %cst_15 = arith.constant dense<0.000000e+00> : vector<16xf32>
    %29 = vector.multi_reduction <add>, %28, %cst_15 [1] : vector<16x16xf32> to vector<16xf32>
    %30 = vector.shape_cast %29 : vector<16xf32> to vector<16x1xf32>
    %c0_16 = arith.constant 0 : index
    %c0_17 = arith.constant 0 : index
    %31 = vector.load %arg9[%c0_16, %c0_17] : memref<1x1xf32, #tpu.memory_space<vmem>>, vector<1x1xf32>
    %32 = vector.broadcast %31 : vector<1x1xf32> to vector<16x1xf32>
    %33 = arith.addf %30, %32 : vector<16x1xf32>
    %c0_18 = arith.constant 0 : index
    %c0_19 = arith.constant 0 : index
    %34 = vector.load %arg3[%c0_18, %c0_19] : memref<16x1xi32, #tpu.memory_space<vmem>>, vector<16x1xi32>
    %35 = tpu.iota {dimensions = array<i32: 1>} : vector<16x128xi32>
    %36 = vector.broadcast %34 : vector<16x1xi32> to vector<16x128xi32>
    %37 = arith.cmpi eq, %36, %35 : vector<16x128xi32>
    %cst_20 = arith.constant 0.000000e+00 : f32
    %38 = vector.shape_cast %33 : vector<16x1xf32> to vector<16x1xf32>
    %39 = vector.broadcast %38 : vector<16x1xf32> to vector<16x128xf32>
    %40 = vector.broadcast %cst_20 : f32 to vector<16x128xf32>
    %41 = arith.select %37, %39, %40 : vector<16x128xi1>, vector<16x128xf32>
    %c0_21 = arith.constant 0 : index
    %c0_22 = arith.constant 0 : index
    %42 = vector.load %arg11[%c0_21, %c0_22] : memref<1x128xf32, #tpu.memory_space<vmem>>, vector<1x128xf32>
    %cst_23 = arith.constant dense<0.000000e+00> : vector<128xf32>
    %43 = vector.multi_reduction <add>, %41, %cst_23 [0] : vector<16x128xf32> to vector<128xf32>
    %44 = vector.shape_cast %43 : vector<128xf32> to vector<1x128xf32>
    %45 = arith.addf %42, %44 : vector<1x128xf32>
    %c0_24 = arith.constant 0 : index
    %c0_25 = arith.constant 0 : index
    %46 = vector.load %arg11[%c0_24, %c0_25] : memref<1x128xf32, #tpu.memory_space<vmem>>, vector<1x128xf32>
    tpu.vector_store %arg11[%c0_24, %c0_25], %45 {strides = array<i32>} : memref<1x128xf32, #tpu.memory_space<vmem>>, vector<1x128xf32>,
    %c0_i32_26 = arith.constant 0 : i32
    %47 = arith.cmpi eq, %arg1, %c0_i32_26 : i32
    %48 = arith.extui %47 : i1 to i32
    %c0_i32_27 = arith.constant 0 : i32
    %49 = arith.cmpi ne, %48, %c0_i32_27 : i32
    scf.if %49 {
      %c0_28 = arith.constant 0 : index
      %c0_29 = arith.constant 0 : index
      %50 = vector.load %arg11[%c0_28, %c0_29] : memref<1x128xf32, #tpu.memory_space<vmem>>, vector<1x128xf32>
      %51 = vector.shape_cast %50 : vector<1x128xf32> to vector<1x1x128xf32>
      %c0_30 = arith.constant 0 : index
      %c0_31 = arith.constant 0 : index
      %c0_32 = arith.constant 0 : index
      %52 = vector.load %arg10[%c0_30, %c0_31, %c0_32] : memref<1x1x128xf32, #tpu.memory_space<vmem>>, vector<1x1x128xf32>
      tpu.vector_store %arg10[%c0_30, %c0_31, %c0_32], %51 {strides = array<i32>} : memref<1x1x128xf32, #tpu.memory_space<vmem>>, vector<1x1x128xf32>,
    } else {
    }
    return
  }
  func.func @transform_0(%arg0: i32, %arg1: i32) -> (i32, i32) {
    %c1_i32 = arith.constant 1 : i32
    %0 = arith.muli %arg0, %c1_i32 : i32
    %1 = arith.addi %0, %arg1 : i32
    %c0_i32 = arith.constant 0 : i32
    %c0_i32_0 = arith.constant 0 : i32
    return %1, %c0_i32 : i32, i32
  }
  func.func @transform_1(%arg0: i32, %arg1: i32) -> (i32, i32) {
    %c1_i32 = arith.constant 1 : i32
    %0 = arith.muli %arg0, %c1_i32 : i32
    %1 = arith.addi %0, %arg1 : i32
    %c0_i32 = arith.constant 0 : i32
    %c0_i32_0 = arith.constant 0 : i32
    return %1, %c0_i32 : i32, i32
  }
  func.func @transform_2(%arg0: i32, %arg1: i32) -> (i32, i32) {
    %c0_i32 = arith.constant 0 : i32
    %c0_i32_0 = arith.constant 0 : i32
    %c0_i32_1 = arith.constant 0 : i32
    return %c0_i32, %c0_i32_0 : i32, i32
  }
  func.func @transform_3(%arg0: i32, %arg1: i32) -> (i32, i32) {
    %c0_i32 = arith.constant 0 : i32
    %c0_i32_0 = arith.constant 0 : i32
    %c0_i32_1 = arith.constant 0 : i32
    return %c0_i32, %c0_i32_0 : i32, i32
  }
  func.func @transform_4(%arg0: i32, %arg1: i32) -> (i32, i32) {
    %c0_i32 = arith.constant 0 : i32
    %c0_i32_0 = arith.constant 0 : i32
    %c0_i32_1 = arith.constant 0 : i32
    return %c0_i32, %c0_i32_0 : i32, i32
  }
  func.func @transform_5(%arg0: i32, %arg1: i32) -> (i32, i32) {
    %c0_i32 = arith.constant 0 : i32
    %c0_i32_0 = arith.constant 0 : i32
    %c0_i32_1 = arith.constant 0 : i32
    return %c0_i32, %c0_i32_0 : i32, i32
  }
  func.func @transform_6(%arg0: i32, %arg1: i32) -> (i32, i32) {
    %c0_i32 = arith.constant 0 : i32
    %c0_i32_0 = arith.constant 0 : i32
    %c0_i32_1 = arith.constant 0 : i32
    return %c0_i32, %c0_i32_0 : i32, i32
  }
  func.func @transform_7(%arg0: i32, %arg1: i32) -> (i32, i32) {
    %c0_i32 = arith.constant 0 : i32
    %c0_i32_0 = arith.constant 0 : i32
    %c0_i32_1 = arith.constant 0 : i32
    return %c0_i32, %c0_i32_0 : i32, i32
  }
  func.func @transform_8(%arg0: i32, %arg1: i32) -> (i32, i32, i32) {
    %c0_i32 = arith.constant 0 : i32
    %c0_i32_0 = arith.constant 0 : i32
    %c0_i32_1 = arith.constant 0 : i32
    return %arg0, %c0_i32, %c0_i32_0 : i32, i32, i32
  }
}

</mosaic_0001>

<llo_original>
// kernel: tpu_custom_call.1
$region0: #{tpu_custom_call.1}
  #allocation0 [shape = 'u32[]', space=smem, size = 0x4, offset = 0x4, fixed_abs, tag = 'smem constant byte address 0x4 - core index']
  #allocation1 [shape = 'u32[144,128]{1,0:T(1,128)}', space=vmem, size = 0x12000, scoped, tag = 'internal scratch']
  #allocation2 [shape = 'f32[1,128]{1,0:T(1,128)}', space=vmem, size = 0x200, scoped, tag = 'scratch operand']
  #allocation3 [shape = 'f32[1,1]{1,0:T(1,128)S(1)}', space=vmem, size = 0x200, scoped, tag = 'scoped memory for tpu_custom_call.1']
  %s0 = inlined_call_operand.vmem [shape: f32[16,32], index: 0, kind: input, shape index: {}]
  %s1 = inlined_call_operand.vmem [shape: s32[16,1], index: 1, kind: input, shape index: {}]
  %s2 = inlined_call_operand.vmem [shape: f32[32,32], index: 2, kind: input, shape index: {}]
  %s3 = inlined_call_operand.vmem [shape: f32[1,32], index: 3, kind: input, shape index: {}]
  %s4 = inlined_call_operand.vmem [shape: f32[32,16], index: 4, kind: input, shape index: {}]
  %s5 = inlined_call_operand.vmem [shape: f32[1,16], index: 5, kind: input, shape index: {}]
  %s6 = inlined_call_operand.vmem [shape: f32[1,16], index: 6, kind: input, shape index: {}]
  %s7 = inlined_call_operand.<no memory space> [shape: f32[1,1], index: 7, kind: input, shape index: {}]
  %s8 = inlined_call_operand.hbm [shape: f32[1,1,128], index: 8, kind: output, shape index: {}]
  %s9 = sld [smem:[#allocation0]]
  $region50: #{tpu_custom_call.1} parent=0
    _
  %s11 = ssub.s32 1, %s9
  %s12 = scalar_select 0, %s11, %s9
  %v13 = vstv %s7
  %14 = vst [vmem:[#allocation3] sm:$0x1] %v13
  $region1: #{tpu_custom_call.1} parent=0
    #allocation4 [shape = 'u8[512]{0}', space=vmem, size = 0x400, scoped, tag = 'output window, operand 0, single buffered']
    #allocation5 [shape = 's32[1]{0}', space=sflag, size = 0x4, scoped, tag = 'scoped memory for tpu_custom_call.1']
    %15 = vsyncpa [#allocation5], 0
    // Predicated region
    $region2: #{tpu_custom_call.1} parent=1 // pred_check
      _
    $region3: #{tpu_custom_call.1} parent=1 // pred_check_branch
      %17 = sbr.rel (0) target = $region5
    $region4: #{tpu_custom_call.1} parent=1 // pred_region
      %s18 = sadd.s32 0, 0
      %s19 = smul.u32 2, %s18
      %p20 = scmp.lt.s32.totalorder %s19, 1
      %s21 = scalar_select %p20, %s19, 1
      %s22 = smul.addr %s21, 8
      %s23 = scalar_lea.vmem %s0, %s22
      %s24 = sadd.s32 0, 0
      %s25 = smul.u32 2, %s24
    $region5: #{tpu_custom_call.1} parent=1 // pred_fallthru
      _
    // Predicated region
    $region6: #{tpu_custom_call.1} parent=1 // pred_check
      _
    $region7: #{tpu_custom_call.1} parent=1 // pred_check_branch
      %27 = sbr.rel (0) target = $region9
    $region8: #{tpu_custom_call.1} parent=1 // pred_region
      %s28 = sadd.s32 0, 0
      %s29 = smul.u32 2, %s28
      %p30 = scmp.lt.s32.totalorder %s29, 1
      %s31 = scalar_select %p30, %s29, 1
      %s32 = smul.addr %s31, 8
      %s33 = scalar_lea.vmem %s1, %s32
      %s34 = sadd.s32 0, 0
      %s35 = smul.u32 2, %s34
    $region9: #{tpu_custom_call.1} parent=1 // pred_fallthru
      _
    // Predicated region
    $region10: #{tpu_custom_call.1} parent=1 // pred_check
      _
    $region11: #{tpu_custom_call.1} parent=1 // pred_check_branch
      %37 = sbr.rel (0) target = $region13
    $region12: #{tpu_custom_call.1} parent=1 // pred_region
      _
    $region13: #{tpu_custom_call.1} parent=1 // pred_fallthru
      _
    // Predicated region
    $region14: #{tpu_custom_call.1} parent=1 // pred_check
      _
    $region15: #{tpu_custom_call.1} parent=1 // pred_check_branch
      %39 = sbr.rel (0) target = $region17
    $region16: #{tpu_custom_call.1} parent=1 // pred_region
      _
    $region17: #{tpu_custom_call.1} parent=1 // pred_fallthru
      _
    // Predicated region
    $region18: #{tpu_custom_call.1} parent=1 // pred_check
      _
    $region19: #{tpu_custom_call.1} parent=1 // pred_check_branch
      %41 = sbr.rel (0) target = $region21
    $region20: #{tpu_custom_call.1} parent=1 // pred_region
      _
    $region21: #{tpu_custom_call.1} parent=1 // pred_fallthru
      _
    // Predicated region
    $region22: #{tpu_custom_call.1} parent=1 // pred_check
      _
    $region23: #{tpu_custom_call.1} parent=1 // pred_check_branch
      %43 = sbr.rel (0) target = $region25
    $region24: #{tpu_custom_call.1} parent=1 // pred_region
      _
    $region25: #{tpu_custom_call.1} parent=1 // pred_fallthru
      _
    // Predicated region
    $region26: #{tpu_custom_call.1} parent=1 // pred_check
      _
    $region27: #{tpu_custom_call.1} parent=1 // pred_check_branch
      %45 = sbr.rel (0) target = $region29
    $region28: #{tpu_custom_call.1} parent=1 // pred_region
      _
    $region29: #{tpu_custom_call.1} parent=1 // pred_fallthru
      _
    // Predicated region
    $region30: #{tpu_custom_call.1} parent=1 // pred_check
      _
    $region31: #{tpu_custom_call.1} parent=1 // pred_check_branch
      %47 = sbr.rel (0) target = $region33
    $region32: #{tpu_custom_call.1} parent=1 // pred_region
      _
    $region33: #{tpu_custom_call.1} parent=1 // pred_fallthru
      _
    %s48 = sadd.s32 0, 0
    %s49 = smul.u32 2, %s48
    %p50 = scmp.lt.s32.totalorder %s49, 1
    %s51 = scalar_select %p50, %s49, 1
    %s52 = smul.addr %s51, 8
    %s53 = scalar_lea.vmem %s0, %s52
    %s54 = sadd.s32 0, 0
    %s55 = smul.u32 2, %s54
    %p56 = scmp.lt.s32.totalorder %s55, 1
    %s57 = scalar_select %p56, %s55, 1
    %s58 = smul.addr %s57, 8
    %s59 = scalar_lea.vmem %s1, %s58
    %s60 = sadd.s32 0, 0
    %s61 = smul.u32 2, %s60
    %p62 = scmp.lt.s32.totalorder %s61, 1
    %s63 = scalar_select %p62, %s61, 1
    %s64 = smul.addr %s63, 8
    %s65 = scalar_lea.vmem %s0, %s64
    %s66 = sadd.s32 0, 0
    %s67 = smul.u32 2, %s66
    %s68 = sadd.s32 0, 0
    %s69 = smul.u32 2, %s68
    %p70 = scmp.lt.s32.totalorder %s69, 1
    %s71 = scalar_select %p70, %s69, 1
    %s72 = smul.addr %s71, 8
    %s73 = scalar_lea.vmem %s1, %s72
    %s74 = sadd.s32 0, 0
    %s75 = smul.u32 2, %s74
    %p76 = scmp.eq.s32.totalorder 0, 0
    // Predicated region
    $region34: #{tpu_custom_call.1} parent=1 // pred_check
      %p77 = pneg %p76
    $region35: #{tpu_custom_call.1} parent=1 // pred_check_branch
      %79 = sbr.rel (%p77) target = $region37
    $region36: #{tpu_custom_call.1} parent=1 // pred_region
      %80 = vst [vmem:[#allocation2] sm:$0x1] 0.0
    $region37: #{tpu_custom_call.1} parent=1 // pred_fallthru
      _
    %v81 = vld [vmem:[%s65] sm:$0xff]
    %v82 = vld [vmem:[%s65 + $0x8] sm:$0xff]
    %v83 = vld [vmem:[%s2] sm:$0xff]
    %v84 = vld [vmem:[%s2 + $0x8] sm:$0xff]
    %v85 = vld [vmem:[%s2 + $0x10] sm:$0xff]
    %v86 = vld [vmem:[%s2 + $0x18] sm:$0xff]
    %v87 = vld [vmem:[%s3] sm:$0x1]
    %v89 = vlaneseq
    %v90 = vshrl.u32 %v89, 7
    %v91 = vsub.s32 0, %v90
    %v92 = vrot.slane %v87, %v91
    %vm94 = vcmask 261120
    %v96 = vsel %vm94, %v81, 0
    %v99 = vsel %vm94, %v82, 0
    %101 = vmatprep.subr.mxu0 0.0
    %102 = vmatpush1.msra.mxu0 %v83
    %103 = vmatprep.subr.mxu0 0.0
    %104 = vmatpush1.msra.mxu0 %v84
    %105 = vmatprep.subr.mxu0 0.0
    %106 = vmatpush1.msra.mxu0 %v85
    %107 = vmatprep.subr.mxu0 0.0
    %108 = vmatpush1.msra.mxu0 %v86
    %109 = vmatprep.subr.mxu0 0.0
    %110 = vmatpush1.msra.mxu0 0.0
    %111 = vmatprep.subr.mxu0 0.0
    %112 = vmatpush1.msra.mxu0 0.0
    %113 = vmatprep.subr.mxu0 0.0
    %114 = vmatpush1.msra.mxu0 0.0
    %115 = vmatprep.subr.mxu0 0.0
    %116 = vmatpush1.msra.mxu0 0.0
    %117 = vmatprep.subr.mxu0 0.0
    %118 = vmatpush1.msra.mxu0 0.0
    %119 = vmatprep.subr.mxu0 0.0
    %120 = vmatpush1.msra.mxu0 0.0
    %121 = vmatprep.subr.mxu0 0.0
    %122 = vmatpush1.msra.mxu0 0.0
    %123 = vmatprep.subr.mxu0 0.0
    %124 = vmatpush1.msra.mxu0 0.0
    %125 = vmatprep.subr.mxu0 0.0
    %126 = vmatpush1.msra.mxu0 0.0
    %127 = vmatprep.subr.mxu0 0.0
    %128 = vmatpush1.msra.mxu0 0.0
    %129 = vmatprep.subr.mxu0 0.0
    %130 = vmatpush1.msra.mxu0 0.0
    %131 = vmatprep.subr.mxu0 0.0
    %132 = vmatpush1.msra.mxu0 0.0
    %133 = vmatprep.subr.mxu0 0.0
    %134 = vmatpush1.msra.mxu0 0.0
    %135 = vmatprep.subr.mxu0 0.0
    %136 = vmatpush1.msra.mxu0 0.0
    %137 = vmatprep.subr.mxu0 0.0
    %138 = vmatpush1.msra.mxu0 0.0
    %139 = vmatprep.subr.mxu0 0.0
    %140 = vmatpush1.msra.mxu0 0.0
    %141 = vmatprep.subr.mxu0 0.0
    %142 = vmatpush1.msra.mxu0 0.0
    %143 = vmatprep.subr.mxu0 0.0
    %144 = vmatpush1.msra.mxu0 0.0
    %145 = vmatprep.subr.mxu0 0.0
    %146 = vmatpush1.msra.mxu0 0.0
    %147 = vmatprep.subr.mxu0 0.0
    %148 = vmatpush1.msra.mxu0 0.0
    %149 = vmatprep.subr.mxu0 0.0
    %150 = vmatpush1.msra.mxu0 0.0
    %151 = vmatprep.subr.mxu0 0.0
    %152 = vmatpush1.msra.mxu0 0.0
    %153 = vmatprep.subr.mxu0 0.0
    %154 = vmatpush1.msra.mxu0 0.0
    %155 = vmatprep.subr.mxu0 0.0
    %156 = vmatpush1.msra.mxu0 0.0
    %157 = vmatprep.subr.mxu0 0.0
    %158 = vmatpush1.msra.mxu0 0.0
    %159 = vmatprep.subr.mxu0 0.0
    %160 = vmatpush1.msra.mxu0 0.0
    %161 = vmatprep.subr.mxu0 0.0
    %162 = vmatpush1.msra.mxu0 0.0
    %163 = vmatprep.subr.mxu0 0.0
    %164 = vmatpush1.msra.mxu0 0.0
    %165 = vmatprep.mubr.f32.mxu0 0.0
    %166 = vmatmul.mubr.f32.gmra.mrb[0].mxu0 %v96
    %v167 = vpop.f32.mrb[0].mxu0
    %v168 = vadd.f32 %v92, %v167
    %v169 = vpop.f32.mrb[0].mxu0
    %170 = vmatprep.mubr.f32.mxu0 0.0
    %171 = vmatmul.mubr.f32.gmra.mrb[0].mxu0 %v99
    %v172 = vpop.f32.mrb[0].mxu0
    %v173 = vadd.f32 %v92, %v172
    %v174 = vpop.f32.mrb[0].mxu0
    %175 = vdwg.mxu0
    %v176 = vxor.u32 %v168, 2147483648
    %v177 = vxor.u32 %v173, 2147483648
    %v178 = vmul.f32 %v176, 1.442695
    %v179 = vpow.pop %v178
    %v180 = vmul.f32 %v177, 1.442695
    %v181 = vpow.pop %v180
    %v182 = vadd.f32 %v179, 1.0
    %v183 = vadd.f32 %v181, 1.0
    %v184 = vrcp.pop %v182
    %v185 = vmul.f32 1.0, %v184
    %v186 = vrcp.pop %v183
    %v187 = vmul.f32 1.0, %v186
    %v188 = vmul.f32 %v168, %v185
    %v189 = vmul.f32 %v173, %v187
    %v190 = vld [vmem:[%s4] sm:$0xff]
    %v191 = vld [vmem:[%s4 + $0x8] sm:$0xff]
    %v192 = vld [vmem:[%s4 + $0x10] sm:$0xff]
    %v193 = vld [vmem:[%s4 + $0x18] sm:$0xff]
    %v194 = vld [vmem:[%s5] sm:$0x1]
    %v196 = vlaneseq
    %v197 = vshrl.u32 %v196, 7
    %v198 = vsub.s32 0, %v197
    %v199 = vrot.slane %v194, %v198
    %v202 = vsel %vm94, %v188, 0
    %v205 = vsel %vm94, %v189, 0
    %207 = vmatprep.subr.mxu0 0.0
    %208 = vmatpush1.msra.mxu0 %v190
    %209 = vmatprep.subr.mxu0 0.0
    %210 = vmatpush1.msra.mxu0 %v191
    %211 = vmatprep.subr.mxu0 0.0
    %212 = vmatpush1.msra.mxu0 %v192
    %213 = vmatprep.subr.mxu0 0.0
    %214 = vmatpush1.msra.mxu0 %v193
    %215 = vmatprep.subr.mxu0 0.0
    %216 = vmatpush1.msra.mxu0 0.0
    %217 = vmatprep.subr.mxu0 0.0
    %218 = vmatpush1.msra.mxu0 0.0
    %219 = vmatprep.subr.mxu0 0.0
    %220 = vmatpush1.msra.mxu0 0.0
    %221 = vmatprep.subr.mxu0 0.0
    %222 = vmatpush1.msra.mxu0 0.0
    %223 = vmatprep.subr.mxu0 0.0
    %224 = vmatpush1.msra.mxu0 0.0
    %225 = vmatprep.subr.mxu0 0.0
    %226 = vmatpush1.msra.mxu0 0.0
    %227 = vmatprep.subr.mxu0 0.0
    %228 = vmatpush1.msra.mxu0 0.0
    %229 = vmatprep.subr.mxu0 0.0
    %230 = vmatpush1.msra.mxu0 0.0
    %231 = vmatprep.subr.mxu0 0.0
    %232 = vmatpush1.msra.mxu0 0.0
    %233 = vmatprep.subr.mxu0 0.0
    %234 = vmatpush1.msra.mxu0 0.0
    %235 = vmatprep.subr.mxu0 0.0
    %236 = vmatpush1.msra.mxu0 0.0
    %237 = vmatprep.subr.mxu0 0.0
    %238 = vmatpush1.msra.mxu0 0.0
    %239 = vmatprep.subr.mxu0 0.0
    %240 = vmatpush1.msra.mxu0 0.0
    %241 = vmatprep.subr.mxu0 0.0
    %242 = vmatpush1.msra.mxu0 0.0
    %243 = vmatprep.subr.mxu0 0.0
    %244 = vmatpush1.msra.mxu0 0.0
    %245 = vmatprep.subr.mxu0 0.0
    %246 = vmatpush1.msra.mxu0 0.0
    %247 = vmatprep.subr.mxu0 0.0
    %248 = vmatpush1.msra.mxu0 0.0
    %249 = vmatprep.subr.mxu0 0.0
    %250 = vmatpush1.msra.mxu0 0.0
    %251 = vmatprep.subr.mxu0 0.0
    %252 = vmatpush1.msra.mxu0 0.0
    %253 = vmatprep.subr.mxu0 0.0
    %254 = vmatpush1.msra.mxu0 0.0
    %255 = vmatprep.subr.mxu0 0.0
    %256 = vmatpush1.msra.mxu0 0.0
    %257 = vmatprep.subr.mxu0 0.0
    %258 = vmatpush1.msra.mxu0 0.0
    %259 = vmatprep.subr.mxu0 0.0
    %260 = vmatpush1.msra.mxu0 0.0
    %261 = vmatprep.subr.mxu0 0.0
    %262 = vmatpush1.msra.mxu0 0.0
    %263 = vmatprep.subr.mxu0 0.0
    %264 = vmatpush1.msra.mxu0 0.0
    %265 = vmatprep.subr.mxu0 0.0
    %266 = vmatpush1.msra.mxu0 0.0
    %267 = vmatprep.subr.mxu0 0.0
    %268 = vmatpush1.msra.mxu0 0.0
    %269 = vmatprep.subr.mxu0 0.0
    %270 = vmatpush1.msra.mxu0 0.0
    %271 = vmatprep.mubr.f32.mxu0 0.0
    %272 = vmatmul.mubr.f32.gmra.mrb[0].mxu0 %v202
    %v273 = vpop.f32.mrb[0].mxu0
    %v274 = vadd.f32 %v199, %v273
    %v275 = vpop.f32.mrb[0].mxu0
    %276 = vmatprep.mubr.f32.mxu0 0.0
    %277 = vmatmul.mubr.f32.gmra.mrb[0].mxu0 %v205
    %v278 = vpop.f32.mrb[0].mxu0
    %v279 = vadd.f32 %v199, %v278
    %v280 = vpop.f32.mrb[0].mxu0
    %281 = vdwg.mxu0
    %v282 = vxor.u32 %v274, 2147483648
    %v283 = vxor.u32 %v279, 2147483648
    %v284 = vmul.f32 %v282, 1.442695
    %v285 = vpow.pop %v284
    %v286 = vmul.f32 %v283, 1.442695
    %v287 = vpow.pop %v286
    %v288 = vadd.f32 %v285, 1.0
    %v289 = vadd.f32 %v287, 1.0
    %v290 = vrcp.pop %v288
    %v291 = vmul.f32 1.0, %v290
    %v292 = vrcp.pop %v289
    %v293 = vmul.f32 1.0, %v292
    %v294 = vmul.f32 %v274, %v291
    %v295 = vmul.f32 %v279, %v293
    %v296 = vld [vmem:[%s6] sm:$0x1]
    %v298 = vlaneseq
    %v299 = vshrl.u32 %v298, 7
    %v300 = vsub.s32 0, %v299
    %v301 = vrot.slane %v296, %v300
    %v303 = vmul.f32 %v294, %v301
    %v304 = vmul.f32 %v295, %v301
    %vm305 = vcmask 130048
    %v306 = vsel %vm305, %v303, 0.0
    %307 = vadd.xlane.f32.xlu0 %v306
    %v308 = vpop.xlane.xlu0 %307
    %v309 = vsel %vm305, %v304, 0.0
    %310 = vadd.xlane.f32.xlu0 %v309
    %v311 = vpop.xlane.xlu0 %310
    %v312 = vld [vmem:[#allocation3] sm:$0x1]
    %v314 = vlaneseq
    %v315 = vshrl.u32 %v314, 7
    %v316 = vsub.s32 0, %v315
    %v317 = vrot.slane %v312, %v316
    %v319 = vadd.f32 %v308, %v317
    %v320 = vadd.f32 %v311, %v317
    %v321 = vld [vmem:[%s73] sm:$0xff]
    %v322 = vld [vmem:[%s73 + $0x8] sm:$0xff]
    %v323 = vlaneseq
    %v324 = vand.u32 %v323, 127
    %325 = vset.pattern.permute.xlu0 0
    %326 = vperm.xlu0 %325, %v321
    %v327 = vpop.permute.xlu0 %326
    %328 = vset.pattern.permute.xlu0 0
    %329 = vperm.xlu0 %328, %v322
    %v330 = vpop.permute.xlu0 %329
    %vm331 = vcmp.eq.s32.totalorder %v327, %v324
    %vm332 = vcmp.eq.s32.totalorder %v330, %v324
    %334 = vset.pattern.permute.xlu0 0
    %335 = vperm.xlu0 %334, %v319
    %v336 = vpop.permute.xlu0 %335
    %339 = vset.pattern.permute.xlu0 0
    %340 = vperm.xlu0 %339, %v320
    %v341 = vpop.permute.xlu0 %340
    %v343 = vsel %vm331, %v336, 0.0
    %v344 = vsel %vm332, %v341, 0.0
    %v345 = vld [vmem:[#allocation2] sm:$0x1]
    %v346 = vadd.f32 %v343, %v344
    %v347 = vrot.slane %v346, 4
    %v348 = vadd.f32 %v346, %v347
    %v349 = vrot.slane %v348, 2
    %v350 = vadd.f32 %v348, %v349
    %v351 = vrot.slane %v350, 1
    %v352 = vadd.f32 %v350, %v351
    %v353 = vadd.f32 %v345, %v352
    %354 = vst [vmem:[#allocation2] sm:$0x1] %v353
    // Predicated region
    $region38: #{tpu_custom_call.1} parent=1 // pred_check
      %p355 = pneg %p76
    $region39: #{tpu_custom_call.1} parent=1 // pred_check_branch
      %357 = sbr.rel (%p355) target = $region41
    $region40: #{tpu_custom_call.1} parent=1 // pred_region
      %v358 = vld [vmem:[#allocation2] sm:$0x1]
      %359 = vst [vmem:[#allocation4] sm:$0x1] %v358
    $region41: #{tpu_custom_call.1} parent=1 // pred_fallthru
      _
    // Predicated region
    $region42: #{tpu_custom_call.1} parent=1 // pred_check
      _
    $region43: #{tpu_custom_call.1} parent=1 // pred_check_branch
      %361 = sbr.rel (0) target = $region45
    $region44: #{tpu_custom_call.1} parent=1 // pred_region
      %s363 = ssub.s32 16, 16
      %364 = vsyncadd [#allocation5], %s363
      %s366 = sshll.u32 [#allocation4], 4
      %s367 = int_to_ptr.vmem [resolvable:$true] %s366
      %369 = dma.vmem_to_hbm [thread:$0]  %s367, 16, %s8, [#allocation5]
    $region45: #{tpu_custom_call.1} parent=1 // pred_fallthru
      _
    // Predicated region
    $region46: #{tpu_custom_call.1} parent=1 // pred_check
      _
    $region47: #{tpu_custom_call.1} parent=1 // pred_check_branch
      %371 = sbr.rel (0) target = $region49
    $region48: #{tpu_custom_call.1} parent=1 // pred_region
      %372 = dma.done [#allocation5], 16
    $region49: #{tpu_custom_call.1} parent=1 // pred_fallthru
      _
    %373 = vsyncpa [#allocation5], 1

</llo_original>
